<compile_context>
chip_gen: v5e
topology: v5e:2x2
jax: 0.10.0
libtpu: 0.0.40
codegen_flags: <defaults>
</compile_context>

<pallas_src>
import functools

import numpy as np
import jax
import jax.numpy as jnp
from jax.experimental import pallas as pl
from jax.experimental.pallas import tpu as pltpu

_EPS = 1e-6               # torch.nn.functional.pairwise_distance default eps
_MAX_TILE_ROWS = 1024     # 128 edges per row -> 128K edges per grid step


def _edge_loss_kernel(d_ref, o_ref, sum_ref, sq_ref, shift_ref, *,
                      size_factor, n_edges, tile_rows):
    t = pl.program_id(0)
    last = pl.num_programs(0) - 1

    sf = jnp.float32(size_factor)
    # Three dense (S, 128) component planes; fold size_factor + eps in once.
    d0 = d_ref[0] * sf + _EPS
    d1 = d_ref[1] * sf + _EPS
    d2 = d_ref[2] * sf + _EPS
    dist = jnp.sqrt(d0 * d0 + d1 * d1 + d2 * d2)          # (S, 128)

    @pl.when(t == 0)
    def _init():
        sum_ref[...] = jnp.zeros_like(sum_ref)
        sq_ref[...] = jnp.zeros_like(sq_ref)
        # Shift for the single-pass variance (numerical conditioning).
        shift_ref[...] = dist[0:1, 0:1]

    shift = shift_ref[...]                                 # (1, 1)

    @pl.when(t != last)
    def _accumulate_unmasked():
        dm = dist - shift
        sum_ref[...] += dm
        sq_ref[...] += dm * dm

    @pl.when(t == last)
    def _accumulate_masked_and_finalize():
        # Only the final tile can contain padded / ragged lanes: mask them.
        row = jax.lax.broadcasted_iota(jnp.int32, (tile_rows, 128), 0)
        lane = jax.lax.broadcasted_iota(jnp.int32, (tile_rows, 128), 1)
        idx = (t * tile_rows + row) * 128 + lane
        dm = jnp.where(idx < n_edges, dist - shift, 0.0)
        s_full = sum_ref[...] + dm
        q_full = sq_ref[...] + dm * dm
        # Single cross-sublane + cross-lane reduction, once per kernel.
        s = jnp.sum(jnp.sum(s_full, axis=0, keepdims=True),
                    axis=1, keepdims=True)                 # (1, 1)
        q = jnp.sum(jnp.sum(q_full, axis=0, keepdims=True),
                    axis=1, keepdims=True)                 # (1, 1)
        n = jnp.float32(n_edges)
        # Unbiased (ddof=1) variance; shift-invariant formulation.
        var = (q - s * s / n) / (n - 1.0)
        o_ref[...] = jnp.sqrt(jnp.maximum(var, 0.0)).astype(o_ref.dtype)


def edge_loss(x, edges, size_factor=1.0):
    """x: (V, 3) float array, edges: (E, 2) int array.  Returns scalar f32.

    Note: E == 1 yields NaN (ddof=1 divides by zero), matching torch.std.
    """
    x = jnp.asarray(x, jnp.float32)
    edges = jnp.asarray(edges, jnp.int32)
    n_edges = int(edges.shape[0])

    # One component-major diff slab (3, E): gather + gather + subtract fuse
    # into a single XLA fusion, and the kernel reads half the bytes versus
    # shipping both endpoints separately.
    x_cm = x.T                                             # (3, V)
    d = x_cm[:, edges[:, 0]] - x_cm[:, edges[:, 1]]        # (3, E)

    # Pad only up to the 128-lane granularity (<= 127 dummy edges), then view
    # as dense (3, NB, 128) planes.  A ragged last grid block (NB not a tile
    # multiple) is handled by Pallas + the in-kernel mask.
    nb = pl.cdiv(n_edges, 128)
    e128 = nb * 128
    if e128 != n_edges:
        d = jnp.pad(d, ((0, 0), (0, e128 - n_edges)))
    d = d.reshape(3, nb, 128)

    tile_rows = min(nb, _MAX_TILE_ROWS)
    grid = (pl.cdiv(nb, tile_rows),)

    kernel = functools.partial(
        _edge_loss_kernel,
        size_factor=float(size_factor),
        n_edges=n_edges,
        tile_rows=tile_rows,
    )

    out = pl.pallas_call(
        kernel,
        out_shape=jax.ShapeDtypeStruct((1, 1), jnp.float32),
        grid_spec=pltpu.PrefetchScalarGridSpec(
            num_scalar_prefetch=0,
            grid=grid,
            in_specs=[pl.BlockSpec((3, tile_rows, 128), lambda t: (0, t, 0))],
            out_specs=pl.BlockSpec((1, 1), lambda t: (0, 0)),
            scratch_shapes=[
                pltpu.VMEM((tile_rows, 128), jnp.float32),  # sum(dist - shift)
                pltpu.VMEM((tile_rows, 128), jnp.float32),  # sum((dist-shift)^2)
                pltpu.VMEM((1, 1), jnp.float32),            # shift
            ],
        ),
        # Sequential reduction over the edge axis.
        # TODO(synk): if v7x profiling shows residual non-DMA time, add a
        # leading size-2 "parallel" (core) axis with per-core (sum, sumsq)
        # partial outputs combined in the wrapper.
        compiler_params=pltpu.CompilerParams(
            dimension_semantics=("arbitrary",),
            vmem_limit_bytes=32 * 1024 * 1024,
        ),
    )(d)
    return out[0, 0]


def _build_edges_from_faces(faces_np):
    """Mirror EdgeLoss.__init__: unique edge tuples per face (host-side)."""
    edge_set = set()
    for tri in faces_np:
        edge_set.add((int(tri[0]), int(tri[1])))
        edge_set.add((int(tri[1]), int(tri[2])))
        edge_set.add((int(tri[0]), int(tri[2])))
    # sorted for determinism (std is order-invariant anyway)
    return np.array(sorted(edge_set), dtype=np.int32)


def _reference(x, edges, size_factor):
    xs = jnp.asarray(x, jnp.float32) * size_factor
    p1 = xs[edges[:, 0]]
    p2 = xs[edges[:, 1]]
    dist = jnp.sqrt(jnp.sum((p1 - p2 + _EPS) ** 2, axis=-1))
    return jnp.std(dist, ddof=1)


if __name__ == "__main__":
    # Small deterministic mesh: triangle fan over 16 vertices -> 29 edges.
    V = 16
    faces_np = np.array([[0, i + 1, i + 2] for i in range(V - 2)],
                        dtype=np.int64)
    edges_np = _build_edges_from_faces(faces_np)        # (29, 2)

    key = jax.random.PRNGKey(0)
    x = jax.random.normal(key, (V, 3), dtype=jnp.float32)

    size_factor = 1.5
    out = jax.block_until_ready(edge_loss(x, edges_np,
                                          size_factor=size_factor))
    ref = jax.block_until_ready(_reference(x, jnp.asarray(edges_np),
                                           size_factor))
    assert np.allclose(np.asarray(out), np.asarray(ref),
                       rtol=1e-4, atol=1e-6), (out, ref)
    print("KERNEL_OK")
</pallas_src>

<mosaic_0001>
module attributes {stable_mosaic.version = 11 : i64} {
  func.func @_edge_loss_kernel(%arg0: i32, %arg1: memref<3x1x128xf32, #tpu.memory_space<vmem>>, %arg2: memref<1x1xf32, #tpu.memory_space<vmem>>, %arg3: memref<1x128xf32, #tpu.memory_space<vmem>>, %arg4: memref<1x128xf32, #tpu.memory_space<vmem>>, %arg5: memref<1x1xf32, #tpu.memory_space<vmem>>) attributes {dimension_semantics = [#tpu.dimension_semantics<arbitrary>], iteration_bounds = array<i64: 1>, scalar_prefetch = 0 : i64, scratch_operands = 3 : i64, tpu.core_type = #tpu.core_type<tc>, window_params = [{transform_indices = @transform_0, window_bounds = array<i64: 3, 1, 128>}, {pipeline_mode = #tpu.pipeline_mode<synchronous>, transform_indices = @transform_1, window_bounds = array<i64: 1, 1>}]} {
    %c0 = arith.constant 0 : index
    %c0_0 = arith.constant 0 : index
    %c0_1 = arith.constant 0 : index
    %0 = vector.load %arg1[%c0, %c0_0, %c0_1] : memref<3x1x128xf32, #tpu.memory_space<vmem>>, vector<1x1x128xf32>
    %1 = vector.shape_cast %0 : vector<1x1x128xf32> to vector<1x128xf32>
    %cst = arith.constant 1.500000e+00 : f32
    %2 = vector.broadcast %cst : f32 to vector<1x128xf32>
    %3 = arith.mulf %1, %2 : vector<1x128xf32>
    %cst_2 = arith.constant 9.99999997E-7 : f32
    %4 = vector.broadcast %cst_2 : f32 to vector<1x128xf32>
    %5 = arith.addf %3, %4 : vector<1x128xf32>
    %c1 = arith.constant 1 : index
    %c0_3 = arith.constant 0 : index
    %c0_4 = arith.constant 0 : index
    %6 = vector.load %arg1[%c1, %c0_3, %c0_4] : memref<3x1x128xf32, #tpu.memory_space<vmem>>, vector<1x1x128xf32>
    %7 = vector.shape_cast %6 : vector<1x1x128xf32> to vector<1x128xf32>
    %cst_5 = arith.constant 1.500000e+00 : f32
    %8 = vector.broadcast %cst_5 : f32 to vector<1x128xf32>
    %9 = arith.mulf %7, %8 : vector<1x128xf32>
    %cst_6 = arith.constant 9.99999997E-7 : f32
    %10 = vector.broadcast %cst_6 : f32 to vector<1x128xf32>
    %11 = arith.addf %9, %10 : vector<1x128xf32>
    %c2 = arith.constant 2 : index
    %c0_7 = arith.constant 0 : index
    %c0_8 = arith.constant 0 : index
    %12 = vector.load %arg1[%c2, %c0_7, %c0_8] : memref<3x1x128xf32, #tpu.memory_space<vmem>>, vector<1x1x128xf32>
    %13 = vector.shape_cast %12 : vector<1x1x128xf32> to vector<1x128xf32>
    %cst_9 = arith.constant 1.500000e+00 : f32
    %14 = vector.broadcast %cst_9 : f32 to vector<1x128xf32>
    %15 = arith.mulf %13, %14 : vector<1x128xf32>
    %cst_10 = arith.constant 9.99999997E-7 : f32
    %16 = vector.broadcast %cst_10 : f32 to vector<1x128xf32>
    %17 = arith.addf %15, %16 : vector<1x128xf32>
    %18 = arith.mulf %5, %5 : vector<1x128xf32>
    %19 = arith.mulf %11, %11 : vector<1x128xf32>
    %20 = arith.addf %18, %19 : vector<1x128xf32>
    %21 = arith.mulf %17, %17 : vector<1x128xf32>
    %22 = arith.addf %20, %21 : vector<1x128xf32>
    %23 = math.sqrt %22 : vector<1x128xf32>
    %c0_i32 = arith.constant 0 : i32
    %24 = arith.cmpi eq, %arg0, %c0_i32 : i32
    %25 = arith.extui %24 : i1 to i32
    %c0_i32_11 = arith.constant 0 : i32
    %26 = arith.cmpi ne, %25, %c0_i32_11 : i32
    scf.if %26 {
      %cst_18 = arith.constant 0.000000e+00 : f32
      %34 = vector.broadcast %cst_18 : f32 to vector<1x128xf32>
      %c0_19 = arith.constant 0 : index
      %c0_20 = arith.constant 0 : index
      %35 = vector.load %arg3[%c0_19, %c0_20] : memref<1x128xf32, #tpu.memory_space<vmem>>, vector<1x128xf32>
      tpu.vector_store %arg3[%c0_19, %c0_20], %34 {strides = array<i32>} : memref<1x128xf32, #tpu.memory_space<vmem>>, vector<1x128xf32>,
      %cst_21 = arith.constant 0.000000e+00 : f32
      %36 = vector.broadcast %cst_21 : f32 to vector<1x128xf32>
      %c0_22 = arith.constant 0 : index
      %c0_23 = arith.constant 0 : index
      %37 = vector.load %arg4[%c0_22, %c0_23] : memref<1x128xf32, #tpu.memory_space<vmem>>, vector<1x128xf32>
      tpu.vector_store %arg4[%c0_22, %c0_23], %36 {strides = array<i32>} : memref<1x128xf32, #tpu.memory_space<vmem>>, vector<1x128xf32>,
      %38 = vector.extract_strided_slice %23 {offsets = [0, 0], sizes = [1, 1], strides = [1, 1]} : vector<1x128xf32> to vector<1x1xf32>
      %c0_24 = arith.constant 0 : index
      %c0_25 = arith.constant 0 : index
      %39 = vector.load %arg5[%c0_24, %c0_25] : memref<1x1xf32, #tpu.memory_space<vmem>>, vector<1x1xf32>
      tpu.vector_store %arg5[%c0_24, %c0_25], %38 {strides = array<i32>} : memref<1x1xf32, #tpu.memory_space<vmem>>, vector<1x1xf32>,
    } else {
    }
    %c0_12 = arith.constant 0 : index
    %c0_13 = arith.constant 0 : index
    %27 = vector.load %arg5[%c0_12, %c0_13] : memref<1x1xf32, #tpu.memory_space<vmem>>, vector<1x1xf32>
    %c0_i32_14 = arith.constant 0 : i32
    %28 = arith.cmpi ne, %arg0, %c0_i32_14 : i32
    %29 = arith.extui %28 : i1 to i32
    %c0_i32_15 = arith.constant 0 : i32
    %30 = arith.cmpi ne, %29, %c0_i32_15 : i32
    scf.if %30 {
      %34 = vector.broadcast %27 : vector<1x1xf32> to vector<1x128xf32>
      %35 = arith.subf %23, %34 : vector<1x128xf32>
      %c0_18 = arith.constant 0 : index
      %c0_19 = arith.constant 0 : index
      %36 = vector.load %arg3[%c0_18, %c0_19] : memref<1x128xf32, #tpu.memory_space<vmem>>, vector<1x128xf32>
      %37 = arith.addf %36, %35 : vector<1x128xf32>
      %c0_20 = arith.constant 0 : index
      %c0_21 = arith.constant 0 : index
      %38 = vector.load %arg3[%c0_20, %c0_21] : memref<1x128xf32, #tpu.memory_space<vmem>>, vector<1x128xf32>
      tpu.vector_store %arg3[%c0_20, %c0_21], %37 {strides = array<i32>} : memref<1x128xf32, #tpu.memory_space<vmem>>, vector<1x128xf32>,
      %c0_22 = arith.constant 0 : index
      %c0_23 = arith.constant 0 : index
      %39 = vector.load %arg4[%c0_22, %c0_23] : memref<1x128xf32, #tpu.memory_space<vmem>>, vector<1x128xf32>
      %40 = arith.mulf %35, %35 : vector<1x128xf32>
      %41 = arith.addf %39, %40 : vector<1x128xf32>
      %c0_24 = arith.constant 0 : index
      %c0_25 = arith.constant 0 : index
      %42 = vector.load %arg4[%c0_24, %c0_25] : memref<1x128xf32, #tpu.memory_space<vmem>>, vector<1x128xf32>
      tpu.vector_store %arg4[%c0_24, %c0_25], %41 {strides = array<i32>} : memref<1x128xf32, #tpu.memory_space<vmem>>, vector<1x128xf32>,
    } else {
    }
    %c0_i32_16 = arith.constant 0 : i32
    %31 = arith.cmpi eq, %arg0, %c0_i32_16 : i32
    %32 = arith.extui %31 : i1 to i32
    %c0_i32_17 = arith.constant 0 : i32
    %33 = arith.cmpi ne, %32, %c0_i32_17 : i32
    scf.if %33 {
      %34 = tpu.iota {dimensions = array<i32: 0>} : vector<1x128xi32>
      %35 = tpu.iota {dimensions = array<i32: 1>} : vector<1x128xi32>
      %c1_i32 = arith.constant 1 : i32
      %36 = arith.muli %arg0, %c1_i32 : i32
      %37 = vector.broadcast %36 : i32 to vector<1x128xi32>
      %38 = arith.addi %37, %34 : vector<1x128xi32>
      %c128_i32 = arith.constant 128 : i32
      %39 = vector.broadcast %c128_i32 : i32 to vector<1x128xi32>
      %40 = arith.muli %38, %39 : vector<1x128xi32>
      %41 = arith.addi %40, %35 : vector<1x128xi32>
      %c29_i32 = arith.constant 29 : i32
      %42 = vector.broadcast %c29_i32 : i32 to vector<1x128xi32>
      %43 = arith.cmpi slt, %41, %42 : vector<1x128xi32>
      %44 = vector.broadcast %27 : vector<1x1xf32> to vector<1x128xf32>
      %45 = arith.subf %23, %44 : vector<1x128xf32>
      %cst_18 = arith.constant 0.000000e+00 : f32
      %46 = vector.broadcast %cst_18 : f32 to vector<1x128xf32>
      %47 = arith.select %43, %45, %46 : vector<1x128xi1>, vector<1x128xf32>
      %c0_19 = arith.constant 0 : index
      %c0_20 = arith.constant 0 : index
      %48 = vector.load %arg3[%c0_19, %c0_20] : memref<1x128xf32, #tpu.memory_space<vmem>>, vector<1x128xf32>
      %49 = arith.addf %48, %47 : vector<1x128xf32>
      %c0_21 = arith.constant 0 : index
      %c0_22 = arith.constant 0 : index
      %50 = vector.load %arg4[%c0_21, %c0_22] : memref<1x128xf32, #tpu.memory_space<vmem>>, vector<1x128xf32>
      %51 = arith.mulf %47, %47 : vector<1x128xf32>
      %52 = arith.addf %50, %51 : vector<1x128xf32>
      %cst_23 = arith.constant dense<0.000000e+00> : vector<128xf32>
      %53 = vector.multi_reduction <add>, %49, %cst_23 [0] : vector<1x128xf32> to vector<128xf32>
      %54 = vector.shape_cast %53 : vector<128xf32> to vector<1x128xf32>
      %cst_24 = arith.constant dense<0.000000e+00> : vector<1xf32>
      %55 = vector.multi_reduction <add>, %54, %cst_24 [1] : vector<1x128xf32> to vector<1xf32>
      %56 = vector.shape_cast %55 : vector<1xf32> to vector<1x1xf32>
      %cst_25 = arith.constant dense<0.000000e+00> : vector<128xf32>
      %57 = vector.multi_reduction <add>, %52, %cst_25 [0] : vector<1x128xf32> to vector<128xf32>
      %58 = vector.shape_cast %57 : vector<128xf32> to vector<1x128xf32>
      %cst_26 = arith.constant dense<0.000000e+00> : vector<1xf32>
      %59 = vector.multi_reduction <add>, %58, %cst_26 [1] : vector<1x128xf32> to vector<1xf32>
      %60 = vector.shape_cast %59 : vector<1xf32> to vector<1x1xf32>
      %61 = arith.mulf %56, %56 : vector<1x1xf32>
      %cst_27 = arith.constant 2.900000e+01 : f32
      %62 = vector.broadcast %cst_27 : f32 to vector<1x1xf32>
      %63 = arith.divf %61, %62 : vector<1x1xf32>
      %64 = arith.subf %60, %63 : vector<1x1xf32>
      %cst_28 = arith.constant 2.900000e+01 : f32
      %cst_29 = arith.constant 1.000000e+00 : f32
      %65 = arith.subf %cst_28, %cst_29 : f32
      %66 = vector.broadcast %65 : f32 to vector<1x1xf32>
      %67 = arith.divf %64, %66 : vector<1x1xf32>
      %cst_30 = arith.constant 0.000000e+00 : f32
      %68 = vector.broadcast %cst_30 : f32 to vector<1x1xf32>
      %69 = arith.maximumf %67, %68 : vector<1x1xf32>
      %70 = math.sqrt %69 : vector<1x1xf32>
      %c0_31 = arith.constant 0 : index
      %c0_32 = arith.constant 0 : index
      %71 = vector.load %arg2[%c0_31, %c0_32] : memref<1x1xf32, #tpu.memory_space<vmem>>, vector<1x1xf32>
      tpu.vector_store %arg2[%c0_31, %c0_32], %70 {strides = array<i32>} : memref<1x1xf32, #tpu.memory_space<vmem>>, vector<1x1xf32>,
    } else {
    }
    return
  }
  func.func @transform_0(%arg0: i32) -> (i32, i32, i32) {
    %c0_i32 = arith.constant 0 : i32
    %c0_i32_0 = arith.constant 0 : i32
    %c0_i32_1 = arith.constant 0 : i32
    return %c0_i32, %arg0, %c0_i32_0 : i32, i32, i32
  }
  func.func @transform_1(%arg0: i32) -> (i32, i32) {
    %c0_i32 = arith.constant 0 : i32
    %c0_i32_0 = arith.constant 0 : i32
    %c0_i32_1 = arith.constant 0 : i32
    return %c0_i32, %c0_i32_0 : i32, i32
  }
}

</mosaic_0001>

<llo_original>
// kernel: tpu_custom_call.1
$region0: #{tpu_custom_call.1}
  #allocation0 [shape = 'u32[]', space=smem, size = 0x4, offset = 0x4, fixed_abs, tag = 'smem constant byte address 0x4 - core index']
  #allocation1 [shape = 'u32[72,128]{1,0:T(1,128)}', space=vmem, size = 0x9000, scoped, tag = 'internal scratch']
  #allocation2 [shape = 'f32[1,128]{1,0:T(1,128)}', space=vmem, size = 0x200, scoped, tag = 'scratch operand']
  #allocation3 [shape = 'f32[1,128]{1,0:T(1,128)}', space=vmem, size = 0x200, scoped, tag = 'scratch operand']
  #allocation4 [shape = 'f32[1,1]{1,0:T(1,128)}', space=vmem, size = 0x200, scoped, tag = 'scratch operand']
  %s0 = inlined_call_operand.hbm [shape: f32[3,1,128], index: 0, kind: input, shape index: {}]
  %s1 = inlined_call_operand.hbm [shape: f32[1,1], index: 1, kind: output, shape index: {}]
  %s2 = sld [smem:[#allocation0]]
  $region30: #{tpu_custom_call.1} parent=0
    _
  %s4 = ssub.s32 1, %s2
  %s5 = scalar_select 0, %s4, %s2
  $region1: #{tpu_custom_call.1} parent=0
    #allocation5 [shape = 'u8[1536]{0}', space=vmem, size = 0x800, scoped, tag = 'input window, operand 0, single buffered']
    #allocation6 [shape = 's32[1]{0}', space=sflag, size = 0x4, scoped, tag = 'scoped memory for tpu_custom_call.1']
    #allocation7 [shape = 's32[1]{0}', space=sflag, size = 0x4, scoped, tag = 'scoped memory for tpu_custom_call.1']
    #allocation8 [shape = 'u8[512]{0}', space=vmem, size = 0x400, scoped, tag = 'output window, operand 0, single buffered']
    %6 = vsyncpa [#allocation6], 0
    %7 = vsyncpa [#allocation7], 0
    // Predicated region
    $region2: #{tpu_custom_call.1} parent=1 // pred_check
      _
    $region3: #{tpu_custom_call.1} parent=1 // pred_check_branch
      %9 = sbr.rel (0) target = $region5
    $region4: #{tpu_custom_call.1} parent=1 // pred_region
      %11 = vsyncadd [#allocation6], 0
      %s12 = sshll.u32 %s0, 4
      %s13 = int_to_ptr.hbm [resolvable:$true] %s12
      %s14 = sshll.u32 [#allocation5], 4
      %s15 = int_to_ptr.vmem [resolvable:$true] %s14
      %20 = dma.hbm_to_vmem [thread:$0]  %s13, 48, %s15, [#allocation6], 16, 16, 1
    $region5: #{tpu_custom_call.1} parent=1 // pred_fallthru
      _
    // Predicated region
    $region6: #{tpu_custom_call.1} parent=1 // pred_check
      _
    $region7: #{tpu_custom_call.1} parent=1 // pred_check_branch
      %22 = sbr.rel (0) target = $region9
    $region8: #{tpu_custom_call.1} parent=1 // pred_region
      %24 = dma.done [#allocation6], 48
    $region9: #{tpu_custom_call.1} parent=1 // pred_fallthru
      _
    %v25 = vld [vmem:[#allocation5] sm:$0x1]
    %v26 = vmul.f32 %v25, 1.5
    %v27 = vadd.f32 %v26, 1e-06
    %s28 = scalar_lea.vmem [#allocation5], 1
    %v29 = vld [vmem:[%s28] sm:$0x1]
    %v30 = vmul.f32 %v29, 1.5
    %v31 = vadd.f32 %v30, 1e-06
    %s32 = scalar_lea.vmem [#allocation5], 2
    %v33 = vld [vmem:[%s32] sm:$0x1]
    %v34 = vmul.f32 %v33, 1.5
    %v35 = vadd.f32 %v34, 1e-06
    %v36 = vmul.f32 %v27, %v27
    %v37 = vmul.f32 %v31, %v31
    %v38 = vadd.f32 %v36, %v37
    %v39 = vmul.f32 %v35, %v35
    %v40 = vadd.f32 %v38, %v39
    %v41 = vrsqrt.pop %v40
    %v42 = vmul.f32 %v41, %v40
    %v43 = vmul.f32 %v42, %v41
    %v44 = vmul.f32 0.5, %v43
    %v45 = vsub.f32 1.5, %v44
    %v46 = vmul.f32 %v41, %v45
    %v47 = vmul.f32 %v40, %v46
    %vm48 = vcmp.eq.f32.partialorder %v40, inf
    %v49 = vsel %vm48, %v40, %v47
    %vm50 = vcmp.eq.f32.partialorder %v40, 0.0
    %v51 = vand.u32 %v40, 2147483648
    %v52 = vsel %vm50, %v51, %v49
    %p53 = scmp.eq.s32.totalorder 0, 0
    // Predicated region
    $region10: #{tpu_custom_call.1} parent=1 // pred_check
      %p54 = pneg %p53
    $region11: #{tpu_custom_call.1} parent=1 // pred_check_branch
      %56 = sbr.rel (%p54) target = $region13
    $region12: #{tpu_custom_call.1} parent=1 // pred_region
      %57 = vst [vmem:[#allocation2] sm:$0x1] 0.0
      %58 = vst [vmem:[#allocation3] sm:$0x1] 0.0
      %vm59 = vcmask 0
      %60 = vst.msk [vmem:[#allocation4] sm:$0x1] %vm59, %v52
    $region13: #{tpu_custom_call.1} parent=1 // pred_fallthru
      _
    %v61 = vld [vmem:[#allocation4] sm:$0x1]
    %p62 = scmp.ne.s32.totalorder 0, 0
    // Predicated region
    $region14: #{tpu_custom_call.1} parent=1 // pred_check
      %p63 = pneg %p62
    $region15: #{tpu_custom_call.1} parent=1 // pred_check_branch
      %65 = sbr.rel (%p63) target = $region17
    $region16: #{tpu_custom_call.1} parent=1 // pred_region
      %67 = vset.pattern.permute.xlu0 0
      %68 = vperm.xlu0 %67, %v61
      %v69 = vpop.permute.xlu0 %68
      %v71 = vperm.slane %v69, 0
      %v72 = vsub.f32 %v52, %v71
      %v73 = vld [vmem:[#allocation2] sm:$0x1]
      %v74 = vadd.f32 %v73, %v72
      %75 = vst [vmem:[#allocation2] sm:$0x1] %v74
      %v76 = vld [vmem:[#allocation3] sm:$0x1]
      %v77 = vmul.f32 %v72, %v72
      %v78 = vadd.f32 %v76, %v77
      %79 = vst [vmem:[#allocation3] sm:$0x1] %v78
    $region17: #{tpu_custom_call.1} parent=1 // pred_fallthru
      _
    // Predicated region
    $region18: #{tpu_custom_call.1} parent=1 // pred_check
      %p80 = pneg %p53
    $region19: #{tpu_custom_call.1} parent=1 // pred_check_branch
      %82 = sbr.rel (%p80) target = $region21
    $region20: #{tpu_custom_call.1} parent=1 // pred_region
      %v83 = vlaneseq
      %v84 = vshrl.u32 %v83, 7
      %v85 = vlaneseq
      %v86 = vand.u32 %v85, 127
      %v87 = vstv 0
      %v88 = vadd.s32 %v87, %v84
      %v89 = vmul.u32 %v88, 128
      %v90 = vadd.s32 %v89, %v86
      %vm91 = vcmp.lt.s32.totalorder %v90, 29
      %93 = vset.pattern.permute.xlu0 0
      %94 = vperm.xlu0 %93, %v61
      %v95 = vpop.permute.xlu0 %94
      %v97 = vperm.slane %v95, 0
      %v98 = vsub.f32 %v52, %v97
      %v99 = vsel %vm91, %v98, 0.0
      %v100 = vld [vmem:[#allocation2] sm:$0x1]
      %v101 = vadd.f32 %v100, %v99
      %v102 = vld [vmem:[#allocation3] sm:$0x1]
      %v103 = vmul.f32 %v99, %v99
      %v104 = vadd.f32 %v102, %v103
      %v105 = vadd.f32 %v101, 0.0
      %vm106 = vcmask 1040384
      %v107 = vsel %vm106, %v105, 0.0
      %108 = vadd.xlane.f32.xlu0 %v107
      %v109 = vpop.xlane.xlu0 %108
      %v110 = vadd.f32 %v104, 0.0
      %v111 = vsel %vm106, %v110, 0.0
      %112 = vadd.xlane.f32.xlu0 %v111
      %v113 = vpop.xlane.xlu0 %112
      %v114 = vmul.f32 %v109, %v109
      %v115 = vrcp.pop 29.0
      %v116 = vmul.f32 29.0, %v115
      %v117 = vsub.f32 1.0, %v116
      %v118 = vmul.f32 %v115, %v117
      %v119 = vadd.f32 %v115, %v118
      %vm120 = vweird.f32 %v115
      %v121 = vsel %vm120, %v115, %v119
      %v122 = vmul.f32 %v114, %v121
      %v123 = vsub.f32 %v113, %v122
      %v124 = vrcp.pop 28.0
      %v125 = vmul.f32 28.0, %v124
      %v126 = vsub.f32 1.0, %v125
      %v127 = vmul.f32 %v124, %v126
      %v128 = vadd.f32 %v124, %v127
      %vm129 = vweird.f32 %v124
      %v130 = vsel %vm129, %v124, %v128
      %v131 = vmul.f32 %v123, %v130
      %v132 = vmax.f32 %v131, 0.0
      %v133 = vrsqrt.pop %v132
      %v134 = vmul.f32 %v133, %v132
      %v135 = vmul.f32 %v134, %v133
      %v136 = vmul.f32 0.5, %v135
      %v137 = vsub.f32 1.5, %v136
      %v138 = vmul.f32 %v133, %v137
      %v139 = vmul.f32 %v132, %v138
      %vm140 = vcmp.eq.f32.partialorder %v132, inf
      %v141 = vsel %vm140, %v132, %v139
      %vm142 = vcmp.eq.f32.partialorder %v132, 0.0
      %v143 = vand.u32 %v132, 2147483648
      %v144 = vsel %vm142, %v143, %v141
      %vm145 = vcmask 0
      %146 = vst.msk [vmem:[#allocation8] sm:$0x1] %vm145, %v144
    $region21: #{tpu_custom_call.1} parent=1 // pred_fallthru
      _
    // Predicated region
    $region22: #{tpu_custom_call.1} parent=1 // pred_check
      _
    $region23: #{tpu_custom_call.1} parent=1 // pred_check_branch
      %148 = sbr.rel (0) target = $region25
    $region24: #{tpu_custom_call.1} parent=1 // pred_region
      %150 = vsyncadd [#allocation7], 0
      %s152 = sshll.u32 [#allocation8], 4
      %s153 = int_to_ptr.vmem [resolvable:$true] %s152
      %s154 = sshll.u32 %s1, 4
      %s155 = int_to_ptr.hbm [resolvable:$true] %s154
      %157 = dma.vmem_to_hbm [thread:$0]  %s153, 16, %s155, [#allocation7]
    $region25: #{tpu_custom_call.1} parent=1 // pred_fallthru
      _
    // Predicated region
    $region26: #{tpu_custom_call.1} parent=1 // pred_check
      _
    $region27: #{tpu_custom_call.1} parent=1 // pred_check_branch
      %159 = sbr.rel (0) target = $region29
    $region28: #{tpu_custom_call.1} parent=1 // pred_region
      %161 = dma.done [#allocation7], 16
    $region29: #{tpu_custom_call.1} parent=1 // pred_fallthru
      _
    %162 = vsyncpa [#allocation6], 1
    %163 = vsyncpa [#allocation7], 1

</llo_original>
